<compile_context>
chip_gen: v7x
topology: tpu7x:2x2x1
jax: 0.10.0
libtpu: 0.0.40
codegen_flags: <defaults>
</compile_context>

<pallas_src>
import functools
import math

import jax
import jax.numpy as jnp
from jax.experimental import pallas as pl
from jax.experimental.pallas import tpu as pltpu


# ----------------------------------------------------------------------------- #
# Model constants
# ----------------------------------------------------------------------------- #
EMBED_DIM = 768
DEPTH = 12
NUM_HEADS = 12
HEAD_DIM = EMBED_DIM // NUM_HEADS
MLP_HIDDEN = 4 * EMBED_DIM
PATCH = 16
OUT_INDICES = (2, 11)
NUM_CLASSES = 2
REGION_RES = (8, 8)

LN_EPS = 1e-6
# <= default scoped VMEM on v6e/v7x (32 MiB); raises v5e's 16 MiB default a bit.
_VMEM_LIMIT = 32 * 1024 * 1024


def _pick_tile(dim, target, align):
    """Largest multiple of `align` <= target that evenly divides `dim`;
    falls back to the full dimension (always a legal block shape)."""
    if dim <= target:
        return dim
    t = (target // align) * align
    while t >= align:
        if dim % t == 0:
            return t
        t -= align
    return dim


# ----------------------------------------------------------------------------- #
# Fused (LayerNorm?) -> matmul -> bias -> act? -> residual? kernel
# ----------------------------------------------------------------------------- #
def _make_fused_linear_kernel(act, has_ln, has_res):
    def kernel(*refs):
        it = iter(refs)
        x_ref = next(it)
        g_ref = next(it) if has_ln else None
        bln_ref = next(it) if has_ln else None
        w_ref = next(it)
        b_ref = next(it)
        r_ref = next(it) if has_res else None
        o_ref = next(it)

        x = x_ref[...]
        if has_ln:
            # LayerNorm over the full feature dim (K is resident, not tiled).
            x = x.astype(jnp.float32)
            mu = jnp.mean(x, axis=-1, keepdims=True)
            var = jnp.mean((x - mu) ** 2, axis=-1, keepdims=True)
            x = (x - mu) * jax.lax.rsqrt(var + LN_EPS)
            x = x * g_ref[...].astype(jnp.float32) + bln_ref[...].astype(jnp.float32)
        # bf16 MXU operands, f32 accumulation.
        y = jnp.dot(x.astype(jnp.bfloat16), w_ref[...].astype(jnp.bfloat16),
                    preferred_element_type=jnp.float32)
        y = y + b_ref[...].astype(jnp.float32)
        if act == "gelu":
            y = jax.nn.gelu(y, approximate=True)
        elif act == "relu":
            y = jnp.maximum(y, 0.0)
        if has_res:
            y = y + r_ref[...].astype(jnp.float32)
        o_ref[...] = y.astype(o_ref.dtype)

    return kernel


@functools.partial(jax.jit, static_argnames=("act", "out_dtype"))
def linear_fused(x, w, b, ln_g=None, ln_b=None, residual=None, act=None,
                 out_dtype=jnp.float32):
    """y = act(LN?(x) @ w + b) (+ residual).

    x: (M, K), w: (K, N) bf16, b: (N,).  Tiled over (M, N); K stays resident so the
    feature-dim LayerNorm can be fused.  Both grid axes are 'parallel' (megacore).
    """
    M, K = x.shape
    N = w.shape[1]
    has_ln = ln_g is not None
    has_res = residual is not None

    tm = _pick_tile(M, 256, 8)
    tn = _pick_tile(N, 512, 128)
    grid = (M // tm, N // tn)

    in_specs = [pl.BlockSpec((tm, K), lambda i, j: (i, 0))]
    args = [x]
    if has_ln:
        in_specs += [pl.BlockSpec((1, K), lambda i, j: (0, 0)),
                     pl.BlockSpec((1, K), lambda i, j: (0, 0))]
        args += [ln_g, ln_b]
    in_specs += [pl.BlockSpec((K, tn), lambda i, j: (0, j)),
                 pl.BlockSpec((1, tn), lambda i, j: (0, j))]
    args += [w, b.reshape(1, N)]
    if has_res:
        in_specs.append(pl.BlockSpec((tm, tn), lambda i, j: (i, j)))
        args.append(residual)

    return pl.pallas_call(
        _make_fused_linear_kernel(act, has_ln, has_res),
        out_shape=jax.ShapeDtypeStruct((M, N), out_dtype),
        grid=grid,
        in_specs=in_specs,
        out_specs=pl.BlockSpec((tm, tn), lambda i, j: (i, j)),
        compiler_params=pltpu.CompilerParams(
            dimension_semantics=("parallel", "parallel"),
            vmem_limit_bytes=_VMEM_LIMIT,
        ),
    )(*args)


# ----------------------------------------------------------------------------- #
# Fused multi-head attention: one grid step per batch, all heads in-kernel
# ----------------------------------------------------------------------------- #
def _attn_kernel(qkv_ref, o_ref):
    # qkv_ref: (1, S, 3*EMBED_DIM) packed [q | k | v], heads-major inside each.
    scale = 1.0 / math.sqrt(HEAD_DIM)
    outs = []
    for h in range(NUM_HEADS):
        c = h * HEAD_DIM
        q = (qkv_ref[0, :, c:c + HEAD_DIM].astype(jnp.float32) * scale).astype(jnp.bfloat16)
        k = qkv_ref[0, :, EMBED_DIM + c:EMBED_DIM + c + HEAD_DIM].astype(jnp.bfloat16)
        v = qkv_ref[0, :, 2 * EMBED_DIM + c:2 * EMBED_DIM + c + HEAD_DIM].astype(jnp.bfloat16)
        # q @ k^T without an explicit transpose.
        s = jax.lax.dot_general(q, k, (((1,), (1,)), ((), ())),
                                preferred_element_type=jnp.float32)
        s = s - jnp.max(s, axis=-1, keepdims=True)
        p = jnp.exp(s)
        p = p * pl.reciprocal(jnp.sum(p, axis=-1, keepdims=True), approx=True)
        outs.append(jnp.dot(p.astype(jnp.bfloat16), v,
                            preferred_element_type=jnp.float32))
    # Single lane-dense (S, EMBED_DIM) store.
    o_ref[0] = jnp.concatenate(outs, axis=-1).astype(o_ref.dtype)


@jax.jit
def attention(qkv):
    """qkv: (B, S, 3*EMBED_DIM) -> (B, S, EMBED_DIM) in bf16."""
    B, S, _ = qkv.shape
    return pl.pallas_call(
        _attn_kernel,
        out_shape=jax.ShapeDtypeStruct((B, S, EMBED_DIM), jnp.bfloat16),
        grid=(B,),
        in_specs=[pl.BlockSpec((1, S, 3 * EMBED_DIM), lambda b: (b, 0, 0))],
        out_specs=pl.BlockSpec((1, S, EMBED_DIM), lambda b: (b, 0, 0)),
        compiler_params=pltpu.CompilerParams(
            dimension_semantics=("parallel",),
            vmem_limit_bytes=_VMEM_LIMIT,
        ),
    )(qkv)


# ----------------------------------------------------------------------------- #
# ProxyHead combine: softmax over 9 neighbours + weighted sum of class logits
# ----------------------------------------------------------------------------- #
def _proxy_combine_kernel(aff_ref, seg_ref, o_ref):
    # aff_ref: (Tb, rr, 9) affinity logits, seg_ref: (Tb, 9, num_classes)
    a = aff_ref[...].astype(jnp.float32)
    a = a - jnp.max(a, axis=-1, keepdims=True)
    e = jnp.exp(a)
    p = e * pl.reciprocal(jnp.sum(e, axis=-1, keepdims=True), approx=True)
    seg = seg_ref[...].astype(jnp.float32)
    # 9-neighbour weighted sum as pure-VPU multiply-accumulate (no tiny matmuls).
    acc = p[:, :, 0:1] * seg[:, 0:1, :]
    for n in range(1, 9):
        acc = acc + p[:, :, n:n + 1] * seg[:, n:n + 1, :]
    o_ref[...] = acc.astype(o_ref.dtype)


@jax.jit
def proxy_combine(aff, seg_unf):
    """aff: (T, rr, 9), seg_unf: (T, 9, C) -> (T, rr, C); many tokens per grid step."""
    T, RR, NB = aff.shape
    NC = seg_unf.shape[-1]
    tb = _pick_tile(T, 256, 8)
    return pl.pallas_call(
        _proxy_combine_kernel,
        out_shape=jax.ShapeDtypeStruct((T, RR, NC), jnp.float32),
        grid=(T // tb,),
        in_specs=[
            pl.BlockSpec((tb, RR, NB), lambda i: (i, 0, 0)),
            pl.BlockSpec((tb, NB, NC), lambda i: (i, 0, 0)),
        ],
        out_specs=pl.BlockSpec((tb, RR, NC), lambda i: (i, 0, 0)),
        compiler_params=pltpu.CompilerParams(dimension_semantics=("parallel",)),
    )(aff, seg_unf)


# ----------------------------------------------------------------------------- #
# Model (glue in plain JAX, compute in the Pallas kernels above)
# ----------------------------------------------------------------------------- #
def init_params(key, img_size):
    n_tok = (img_size // PATCH) ** 2
    keys = iter(jax.random.split(key, 64))

    def dense(k, shape, scale=0.02):
        # Weights stored in bf16 (MXU-native; halves weight HBM traffic).
        return (scale * jax.random.normal(k, shape, dtype=jnp.float32)).astype(jnp.bfloat16)

    p = {
        "patch_w": dense(next(keys), (3 * PATCH * PATCH, EMBED_DIM)),
        "patch_b": jnp.zeros((EMBED_DIM,), jnp.float32),
        "pos": 0.02 * jax.random.normal(next(keys), (1, n_tok, EMBED_DIM), jnp.float32),
        "blocks": [],
    }
    for _ in range(DEPTH):
        p["blocks"].append(
            dict(
                ln1_g=jnp.ones((1, EMBED_DIM), jnp.float32),
                ln1_b=jnp.zeros((1, EMBED_DIM), jnp.float32),
                qkv_w=dense(next(keys), (EMBED_DIM, 3 * EMBED_DIM)),
                qkv_b=jnp.zeros((3 * EMBED_DIM,), jnp.float32),
                proj_w=dense(next(keys), (EMBED_DIM, EMBED_DIM)),
                proj_b=jnp.zeros((EMBED_DIM,), jnp.float32),
                ln2_g=jnp.ones((1, EMBED_DIM), jnp.float32),
                ln2_b=jnp.zeros((1, EMBED_DIM), jnp.float32),
                fc1_w=dense(next(keys), (EMBED_DIM, MLP_HIDDEN)),
                fc1_b=jnp.zeros((MLP_HIDDEN,), jnp.float32),
                fc2_w=dense(next(keys), (MLP_HIDDEN, EMBED_DIM)),
                fc2_b=jnp.zeros((EMBED_DIM,), jnp.float32),
            )
        )
    rr9 = REGION_RES[0] * REGION_RES[1] * 9
    p["aff1_w"] = dense(next(keys), (EMBED_DIM, EMBED_DIM))
    p["aff1_b"] = jnp.zeros((EMBED_DIM,), jnp.float32)
    p["aff2_w"] = dense(next(keys), (EMBED_DIM, rr9))
    p["aff2_b"] = jnp.zeros((rr9,), jnp.float32)
    p["seg_w"] = dense(next(keys), (EMBED_DIM, NUM_CLASSES))
    p["seg_b"] = jnp.zeros((NUM_CLASSES,), jnp.float32)
    return p


def vit_block(tok, blk, B, N):
    x = tok.reshape(B * N, EMBED_DIM)
    # LN1 fused into the qkv projection; qkv kept bf16 (matmul-only consumer).
    qkv = linear_fused(x, blk["qkv_w"], blk["qkv_b"],
                       ln_g=blk["ln1_g"], ln_b=blk["ln1_b"],
                       out_dtype=jnp.bfloat16)
    attn = attention(qkv.reshape(B, N, 3 * EMBED_DIM)).reshape(B * N, EMBED_DIM)
    # proj with the first residual add fused into the output write.
    tok2 = linear_fused(attn, blk["proj_w"], blk["proj_b"], residual=x)
    # LN2 + GELU fused into fc1; fc2 fuses the second residual add.
    h = linear_fused(tok2, blk["fc1_w"], blk["fc1_b"],
                     ln_g=blk["ln2_g"], ln_b=blk["ln2_b"],
                     act="gelu", out_dtype=jnp.bfloat16)
    tok2 = linear_fused(h, blk["fc2_w"], blk["fc2_b"], residual=tok2)
    return tok2.reshape(B, N, EMBED_DIM)


def unfold3x3(x):
    """x: (B, h, w, C) -> (B, h, w, 9, C); 3x3 neighbourhood with zero padding
    (equivalent to F.unfold(pred, 3, padding=1))."""
    B, h, w, C = x.shape
    xp = jnp.pad(x, ((0, 0), (1, 1), (1, 1), (0, 0)))
    patches = []
    for di in range(3):
        for dj in range(3):
            patches.append(xp[:, di : di + h, dj : dj + w, :])
    return jnp.stack(patches, axis=3)


def _regproxy_forward_impl(x, params):
    # layout: x is NCHW (B, 3, H, W); output is NCHW (B, NUM_CLASSES, H//2, W//2).
    B, C, H, W = x.shape
    h, w = H // PATCH, W // PATCH
    N = h * w

    # --- backbone: patch embedding (16x16 stride-16 conv as a matmul) ---
    patches = (
        x.reshape(B, C, h, PATCH, w, PATCH)
        .transpose(0, 2, 4, 1, 3, 5)
        .reshape(B * N, C * PATCH * PATCH)
    )
    tok = linear_fused(patches, params["patch_w"], params["patch_b"])
    tok = tok.reshape(B, N, EMBED_DIM) + params["pos"]

    feats = []
    for i, blk in enumerate(params["blocks"]):
        tok = vit_block(tok, blk, B, N)
        if i in OUT_INDICES:
            feats.append(tok)
    f_mid, f_last = feats  # features from blocks 2 and 11

    # --- ProxyHead: affinity from mid feature, class logits from last feature ---
    rr = REGION_RES[0] * REGION_RES[1]
    a = linear_fused(f_mid.reshape(B * N, EMBED_DIM), params["aff1_w"], params["aff1_b"],
                     act="relu", out_dtype=jnp.bfloat16)
    a = linear_fused(a, params["aff2_w"], params["aff2_b"])                  # (B*N, rr*9)
    seg = linear_fused(f_last.reshape(B * N, EMBED_DIM), params["seg_w"], params["seg_b"])

    seg_map = seg.reshape(B, h, w, NUM_CLASSES)
    seg_unf = unfold3x3(seg_map).reshape(B * N, 9, NUM_CLASSES)              # (B*N, 9, C)
    aff = a.reshape(B * N, rr, 9)

    out_tok = proxy_combine(aff, seg_unf)                                    # (B*N, rr, C)
    out = (
        out_tok.reshape(B, h, w, REGION_RES[0], REGION_RES[1], NUM_CLASSES)
        .transpose(0, 5, 1, 3, 2, 4)
        .reshape(B, NUM_CLASSES, h * REGION_RES[0], w * REGION_RES[1])
    )
    return out


regproxy_forward = jax.jit(_regproxy_forward_impl)


if __name__ == "__main__":
    img_size = 32  # -> 2x2 token grid, output (B, 2, 16, 16)
    B = 2
    key = jax.random.PRNGKey(0)
    params = init_params(key, img_size)
    x = jax.random.normal(jax.random.fold_in(key, 123), (B, 3, img_size, img_size), jnp.float32)

    out = regproxy_forward(x, params)
    out = jax.block_until_ready(out)

    assert out.shape == (B, NUM_CLASSES, img_size // 2, img_size // 2), out.shape
    assert bool(jnp.all(jnp.isfinite(out)))
    print("KERNEL_OK")
</pallas_src>

<mosaic_0001>
module attributes {stable_mosaic.version = 11 : i64} {
  func.func @kernel(%arg0: i32, %arg1: i32, %arg2: memref<8x768xf32, #tpu.memory_space<vmem>>, %arg3: memref<768x384xbf16, #tpu.memory_space<vmem>>, %arg4: memref<1x384xf32, #tpu.memory_space<vmem>>, %arg5: memref<8x384xf32, #tpu.memory_space<vmem>>) attributes {dimension_semantics = [#tpu.dimension_semantics<parallel>, #tpu.dimension_semantics<parallel>], iteration_bounds = array<i64: 1, 2>, scalar_prefetch = 0 : i64, scratch_operands = 0 : i64, tpu.core_type = #tpu.core_type<tc>, window_params = [{transform_indices = @transform_0, window_bounds = array<i64: 8, 768>}, {transform_indices = @transform_1, window_bounds = array<i64: 768, 384>}, {transform_indices = @transform_2, window_bounds = array<i64: 1, 384>}, {transform_indices = @transform_3, window_bounds = array<i64: 8, 384>}]} {
    %c0 = arith.constant 0 : index
    %c0_0 = arith.constant 0 : index
    %0 = vector.load %arg2[%c0, %c0_0] : memref<8x768xf32, #tpu.memory_space<vmem>>, vector<8x768xf32>
    %1 = arith.truncf %0 : vector<8x768xf32> to vector<8x768xbf16>
    %c0_1 = arith.constant 0 : index
    %c0_2 = arith.constant 0 : index
    %2 = vector.load %arg3[%c0_1, %c0_2] : memref<768x384xbf16, #tpu.memory_space<vmem>>, vector<768x384xbf16>
    %cst = arith.constant dense<0.000000e+00> : vector<8x384xf32>
    %3 = tpu.matmul %1, %2, %cst {dimension_numbers = #tpu.dot_dimension_numbers<[1], [0], [0], [1], [0, 0, 1, 1], [], []>} : vector<8x768xbf16>, vector<768x384xbf16>, vector<8x384xf32> -> vector<8x384xf32>
    %c0_3 = arith.constant 0 : index
    %c0_4 = arith.constant 0 : index
    %4 = vector.load %arg4[%c0_3, %c0_4] : memref<1x384xf32, #tpu.memory_space<vmem>>, vector<1x384xf32>
    %5 = vector.broadcast %4 : vector<1x384xf32> to vector<8x384xf32>
    %6 = arith.addf %3, %5 : vector<8x384xf32>
    %c0_5 = arith.constant 0 : index
    %c0_6 = arith.constant 0 : index
    %7 = vector.load %arg5[%c0_5, %c0_6] : memref<8x384xf32, #tpu.memory_space<vmem>>, vector<8x384xf32>
    tpu.vector_store %arg5[%c0_5, %c0_6], %6 {strides = array<i32>} : memref<8x384xf32, #tpu.memory_space<vmem>>, vector<8x384xf32>,
    return
  }
  func.func @transform_0(%arg0: i32, %arg1: i32) -> (i32, i32) {
    %c0_i32 = arith.constant 0 : i32
    %c0_i32_0 = arith.constant 0 : i32
    return %arg0, %c0_i32 : i32, i32
  }
  func.func @transform_1(%arg0: i32, %arg1: i32) -> (i32, i32) {
    %c0_i32 = arith.constant 0 : i32
    %c0_i32_0 = arith.constant 0 : i32
    return %c0_i32, %arg1 : i32, i32
  }
  func.func @transform_2(%arg0: i32, %arg1: i32) -> (i32, i32) {
    %c0_i32 = arith.constant 0 : i32
    %c0_i32_0 = arith.constant 0 : i32
    return %c0_i32, %arg1 : i32, i32
  }
  func.func @transform_3(%arg0: i32, %arg1: i32) -> (i32, i32) {
    %c0_i32 = arith.constant 0 : i32
    return %arg0, %arg1 : i32, i32
  }
}

</mosaic_0001>

<llo_original>
// kernel: linear_fused.1
$region0: #{linear_fused.1}
  #allocation0 [shape = 'u32[]', space=smem, size = 0x4, offset = 0x4, fixed_abs, tag = 'smem constant byte address 0x4 - core index']
  #allocation1 [shape = 'u32[144,128]{1,0:T(1,128)}', space=vmem, size = 0x12000, scoped, tag = 'internal scratch']
  %s0 = inlined_call_operand.hbm [shape: f32[8,768], index: 0, kind: input, shape index: {}]
  %s1 = inlined_call_operand.hbm [shape: bf16[768,768], index: 1, kind: input, shape index: {}]
  %s2 = inlined_call_operand.vmem [shape: f32[1,768], index: 2, kind: input, shape index: {}]
  %s3 = inlined_call_operand.hbm [shape: f32[8,768], index: 3, kind: output, shape index: {}]
  %s4 = sld [smem:[#allocation0]]
  $region53: #{linear_fused.1} parent=0
    _
  %s6 = ssub.s32 1, %s4
  %s7 = scalar_select 0, %s6, %s4
  $region1: #{linear_fused.1} parent=0
    #allocation2 [shape = 'u8[24576]{0}', space=vmem, size = 0x6000, scoped, tag = 'input window, operand 0, single buffered']
    #allocation3 [shape = 's32[2]{0}', space=sflag, size = 0x8, scoped, tag = 'scoped memory for linear_fused.1']
    #allocation4 [shape = 's32[2]{0}', space=sflag, size = 0x8, scoped, tag = 'scoped memory for linear_fused.1']
    #allocation5 [shape = 'u8[1179648]{0}', space=vmem, size = 0x120000, scoped, tag = 'input window, operand 1']
    #allocation6 [shape = 's32[2]{0}', space=sflag, size = 0x8, scoped, tag = 'scoped memory for linear_fused.1']
    #allocation7 [shape = 'u8[24576]{0}', space=vmem, size = 0x6000, scoped, tag = 'output window, operand 0']
    %8 = vsyncpa [#allocation3], 0
    %9 = vsyncpa [#allocation6], 0
    %s10 = scalar_lea.sflag [#allocation6], 1
    %11 = vsyncpa %s10, 0
    %12 = vsyncpa [#allocation4], 0
    %s13 = scalar_lea.sflag [#allocation4], 1
    %14 = vsyncpa %s13, 0
    loop: start=0, step=1, limit=4
    $region2: #{linear_fused.1} parent=1 // loop_pre_header
      _
    $region3: #{linear_fused.1} parent=1 // loop_header
      %s16 = sphi 0, %s20
      %p17 = scmp.ge.s32.totalorder %s16, 4
      %s23 = sphi 0, %s35
      %s24 = sphi 0, %s31
      %s25 = sphi 0, %s23
      %s26 = sphi 0, %s24
      %s27 = sphi 0, %s25
      %s28 = sphi 0, %s26
      %s38 = sphi 0, %s40
      %s41 = sphi 0, %s38
      %s42 = sphi 0, %s41
      %s58 = sphi 0, %s42
      %s64 = sphi 0, %s66
      %s67 = sphi 0, %s64
      %s68 = sphi 0, %s67
      %s84 = sphi 0, %s68
      %s90 = sphi 0, %s92
      %s93 = sphi 0, %s90
      %s94 = sphi 0, %s93
      %s110 = sphi 0, %s94
      %s118 = sphi 0, %s120
      %s121 = sphi 0, %s118
      %s122 = sphi 0, %s121
      %s138 = sphi 0, %s122
    $region4: #{linear_fused.1} parent=1 // loop_header_branch
      %19 = sbr.rel (%p17) target = $region8
    $region5: #{linear_fused.1} parent=1 // loop_body
      %s21 = ssub.s32 %s16, 1
      %s22 = ssub.s32 %s16, 2
      %s29 = sadd.s32 1, %s24
      %p30 = scmp.ge.s32.totalorder %s29, 2
      %s31 = scalar_select %p30, 0, %s29
      %s32 = sadd.s32 1, %s23
      %s33 = scalar_select %p30, %s32, %s23
      %p34 = scmp.ge.s32.totalorder %s33, 1
      %s35 = scalar_select %p34, 0, %s33
      %s36 = ssub.s32 %s23, %s35
      %p37 = scmp.eq.s32.totalorder %s36, 0
      %s39 = sadd.s32 %s38, 1
      %s40 = scalar_select %p37, %s38, %s39
      %p43 = pneg %p37
      %p44 = scmp.eq.s32.totalorder %s16, 1
      %p45 = por %p43, %p44
      %p46 = scmp.ne.s32.totalorder %s38, %s41
      %p47 = scmp.eq.s32.totalorder %s16, 0
      %p48 = por %p46, %p47
      %p49 = scmp.ne.s32.totalorder %s38, %s41
      %p50 = scmp.eq.s32.totalorder %s21, 1
      %p51 = por %p49, %p50
      %p52 = scmp.ne.s32.totalorder %s41, %s42
      %p53 = scmp.eq.s32.totalorder %s21, 0
      %p54 = por %p52, %p53
      %p55 = scmp.ne.s32.totalorder %s41, %s42
      %p56 = scmp.eq.s32.totalorder %s22, 1
      %p57 = por %p55, %p56
      %p59 = scmp.ne.s32.totalorder %s42, %s58
      %p60 = scmp.eq.s32.totalorder %s22, 0
      %p61 = por %p59, %p60
      %s62 = ssub.s32 %s24, %s31
      %p63 = scmp.eq.s32.totalorder %s62, 0
      %s65 = sadd.s32 %s64, 1
      %s66 = scalar_select %p63, %s64, %s65
      %p69 = pneg %p63
      %p70 = scmp.eq.s32.totalorder %s16, 1
      %p71 = por %p69, %p70
      %p72 = scmp.ne.s32.totalorder %s64, %s67
      %p73 = scmp.eq.s32.totalorder %s16, 0
      %p74 = por %p72, %p73
      %p75 = scmp.ne.s32.totalorder %s64, %s67
      %p76 = scmp.eq.s32.totalorder %s21, 1
      %p77 = por %p75, %p76
      %p78 = scmp.ne.s32.totalorder %s67, %s68
      %p79 = scmp.eq.s32.totalorder %s21, 0
      %p80 = por %p78, %p79
      %p81 = scmp.ne.s32.totalorder %s67, %s68
      %p82 = scmp.eq.s32.totalorder %s22, 1
      %p83 = por %p81, %p82
      %p85 = scmp.ne.s32.totalorder %s68, %s84
      %p86 = scmp.eq.s32.totalorder %s22, 0
      %p87 = por %p85, %p86
      %s88 = ssub.s32 %s24, %s31
      %p89 = scmp.eq.s32.totalorder %s88, 0
      %s91 = sadd.s32 %s90, 1
      %s92 = scalar_select %p89, %s90, %s91
      %p95 = pneg %p89
      %p96 = scmp.eq.s32.totalorder %s16, 1
      %p97 = por %p95, %p96
      %p98 = scmp.ne.s32.totalorder %s90, %s93
      %p99 = scmp.eq.s32.totalorder %s16, 0
      %p100 = por %p98, %p99
      %p101 = scmp.ne.s32.totalorder %s90, %s93
      %p102 = scmp.eq.s32.totalorder %s21, 1
      %p103 = por %p101, %p102
      %p104 = scmp.ne.s32.totalorder %s93, %s94
      %p105 = scmp.eq.s32.totalorder %s21, 0
      %p106 = por %p104, %p105
      %p107 = scmp.ne.s32.totalorder %s93, %s94
      %p108 = scmp.eq.s32.totalorder %s22, 1
      %p109 = por %p107, %p108
      %p111 = scmp.ne.s32.totalorder %s94, %s110
      %p112 = scmp.eq.s32.totalorder %s22, 0
      %p113 = por %p111, %p112
      %s114 = ssub.s32 %s23, %s35
      %s115 = ssub.s32 %s24, %s31
      %s116 = sor.u32 %s114, %s115
      %p117 = scmp.eq.s32.totalorder %s116, 0
      %s119 = sadd.s32 %s118, 1
      %s120 = scalar_select %p117, %s118, %s119
      %p123 = pneg %p117
      %p124 = scmp.eq.s32.totalorder %s16, 1
      %p125 = por %p123, %p124
      %p126 = scmp.ne.s32.totalorder %s118, %s121
      %p127 = scmp.eq.s32.totalorder %s16, 0
      %p128 = por %p126, %p127
      %p129 = scmp.ne.s32.totalorder %s118, %s121
      %p130 = scmp.eq.s32.totalorder %s21, 1
      %p131 = por %p129, %p130
      %p132 = scmp.ne.s32.totalorder %s121, %s122
      %p133 = scmp.eq.s32.totalorder %s21, 0
      %p134 = por %p132, %p133
      %p135 = scmp.ne.s32.totalorder %s121, %s122
      %p136 = scmp.eq.s32.totalorder %s22, 1
      %p137 = por %p135, %p136
      %p139 = scmp.ne.s32.totalorder %s122, %s138
      %p140 = scmp.eq.s32.totalorder %s22, 0
      %p141 = por %p139, %p140
      %p142 = scmp.le.s32.totalorder 1, %s16
      %p143 = scmp.lt.s32.totalorder %s16, 3
      %p144 = pnand %p142, %p143
      %p145 = pneg %p144
      // Predicated region
      $region9: #{linear_fused.1} parent=5 // pred_check
        _
      $region10: #{linear_fused.1} parent=5 // pred_check_branch
        %147 = sbr.rel (%p144) target = $region12
      $region11: #{linear_fused.1} parent=5 // pred_region
        %s148 = ssub.s32 %s16, 1
        // Predicated region
        $region13: #{linear_fused.1} parent=11 // pred_check
          %p149 = pneg %p54
        $region14: #{linear_fused.1} parent=11 // pred_check_branch
          %151 = sbr.rel (%p149) target = $region16
        $region15: #{linear_fused.1} parent=11 // pred_region
          %s153 = ssub.s32 768, 768
          %154 = vsyncadd [#allocation3], %s153
          %s155 = smul.addr %s25, 6
          %s156 = smul.addr %s155, 128
          %s157 = scalar_lea.hbm %s0, %s156
          %s159 = sshll.u32 [#allocation2], 4
          %s160 = int_to_ptr.vmem [resolvable:$true] %s159
          %162 = dma.hbm_to_vmem [thread:$0]  %s157, 768, %s160, [#allocation3]
        $region16: #{linear_fused.1} parent=11 // pred_fallthru
          _
      $region12: #{linear_fused.1} parent=5 // pred_fallthru
        _
      %p163 = scmp.lt.s32.totalorder %s16, 2
      // Predicated region
      $region17: #{linear_fused.1} parent=5 // pred_check
        %p164 = pneg %p163
      $region18: #{linear_fused.1} parent=5 // pred_check_branch
        %166 = sbr.rel (%p164) target = $region20
      $region19: #{linear_fused.1} parent=5 // pred_region
        // Predicated region
        $region21: #{linear_fused.1} parent=19 // pred_check
          %p167 = pneg %p74
        $region22: #{linear_fused.1} parent=19 // pred_check_branch
          %169 = sbr.rel (%p167) target = $region24
        $region23: #{linear_fused.1} parent=19 // pred_region
          %s170 = sand.u32 %s64, 1
          %s171 = scalar_lea.sflag [#allocation6], %s170
          %s172 = sand.u32 %s64, 1
          %s173 = smul.addr %s172, 1152
          %s174 = scalar_lea.vmem [#allocation5], %s173
          %s175 = smul.u32 3, %s24
          %s177 = ssub.s32 18432, 18432
          %178 = vsyncadd %s171, %s177
          %s179 = smul.addr %s175, 64
          %s180 = scalar_lea.hbm %s1, %s179
          %s181 = sshll.u32 %s174, 4
          %s182 = int_to_ptr.vmem [resolvable:$true] %s181
          %187 = dma.hbm_to_vmem [thread:$0]  %s180, 18432, %s182, %s171, 384, 192, 12
        $region24: #{linear_fused.1} parent=19 // pred_fallthru
          _
        // Predicated region
        $region25: #{linear_fused.1} parent=19 // pred_check
          %p188 = pneg %p100
        $region26: #{linear_fused.1} parent=19 // pred_check_branch
          %190 = sbr.rel (%p188) target = $region28
        $region27: #{linear_fused.1} parent=19 // pred_region
          %s191 = smul.u32 3, %s24
          %p192 = scmp.lt.s32.totalorder %s191, 5
          %s193 = scalar_select %p192, %s191, 5
          %s194 = scalar_lea.vmem %s2, %s193
          %s195 = smul.u32 3, %s24
        $region28: #{linear_fused.1} parent=19 // pred_fallthru
          _
      $region20: #{linear_fused.1} parent=5 // pred_fallthru
        _
      %p196 = scmp.le.s32.totalorder 1, %s16
      %p197 = scmp.lt.s32.totalorder %s16, 3
      %p198 = pnand %p196, %p197
      %p199 = pneg %p198
      // Predicated region
      $region29: #{linear_fused.1} parent=5 // pred_check
        _
      $region30: #{linear_fused.1} parent=5 // pred_check_branch
        %201 = sbr.rel (%p198) target = $region32
      $region31: #{linear_fused.1} parent=5 // pred_region
        %s202 = ssub.s32 %s16, 1
        // Predicated region
        $region33: #{linear_fused.1} parent=31 // pred_check
          %p203 = pneg %p54
        $region34: #{linear_fused.1} parent=31 // pred_check_branch
          %205 = sbr.rel (%p203) target = $region36
        $region35: #{linear_fused.1} parent=31 // pred_region
          %206 = dma.done [#allocation3], 768
        $region36: #{linear_fused.1} parent=31 // pred_fallthru
          _
        %s207 = sand.u32 %s67, 1
        %s208 = scalar_lea.sflag [#allocation6], %s207
        %s209 = sand.u32 %s67, 1
        %s210 = smul.addr %s209, 1152
        %s211 = scalar_lea.vmem [#allocation5], %s210
        // Predicated region
        $region37: #{linear_fused.1} parent=31 // pred_check
          %p212 = pneg %p80
        $region38: #{linear_fused.1} parent=31 // pred_check_branch
          %214 = sbr.rel (%p212) target = $region40
        $region39: #{linear_fused.1} parent=31 // pred_region
          %215 = dma.done %s208, 18432
        $region40: #{linear_fused.1} parent=31 // pred_fallthru
          _
        %p216 = pneg %p54
        %p217 = pneg %p51
        %s218 = sand.u32 %s67, 1
        %s219 = scalar_lea.sflag [#allocation6], %s218
        %s220 = sand.u32 %s67, 1
        %s221 = smul.addr %s220, 1152
        %s222 = scalar_lea.vmem [#allocation5], %s221
        %p223 = pneg %p80
        %p224 = pneg %p77
        %s225 = smul.u32 3, %s26
        %p226 = scmp.lt.s32.totalorder %s225, 5
        %s227 = scalar_select %p226, %s225, 5
        %s228 = scalar_lea.vmem %s2, %s227
        %p229 = pneg %p106
        %p230 = pneg %p103
        %p231 = pneg %p134
        %p232 = pneg %p131
        %s233 = sand.u32 %s121, 1
        %s234 = scalar_lea.sflag [#allocation4], %s233
        %s235 = sand.u32 %s121, 1
        %s236 = smul.addr %s235, 24
        %s237 = scalar_lea.vmem [#allocation7], %s236
        %s238 = smul.u32 3, %s26
        %s239 = smul.u32 3, %s26
        %p240 = scmp.lt.s32.totalorder %s239, 5
        %s241 = scalar_select %p240, %s239, 5
        %s242 = scalar_lea.vmem %s2, %s241
        %s243 = smul.u32 3, %s26
        %s244 = smul.u32 3, %s26
        %v246 = vld [vmem:[#allocation2] sm:$0xff]
        %v247 = vld [vmem:[#allocation2 + $0x8] sm:$0xff]
        %v248 = vld [vmem:[#allocation2 + $0x10] sm:$0xff]
        %v249 = vld [vmem:[#allocation2 + $0x18] sm:$0xff]
        %v250 = vld [vmem:[#allocation2 + $0x20] sm:$0xff]
        %v251 = vld [vmem:[#allocation2 + $0x28] sm:$0xff]
        %v252 = vpack.c.bf16 %v246, %v246
        %v253 = vpack.c.bf16 %v247, %v247
        %v254 = vpack.c.bf16 %v248, %v248
        %v255 = vpack.c.bf16 %v249, %v249
        %v256 = vpack.c.bf16 %v250, %v250
        %v257 = vpack.c.bf16 %v251, %v251
        %v258 = vld [vmem:[%s211] sm:$0xff]
        %v259 = vld [vmem:[%s211 + $0x8] sm:$0xf]
        %v260 = vld [vmem:[%s211 + $0xc] sm:$0xff]
        %v261 = vld [vmem:[%s211 + $0x14] sm:$0xf]
        %v262 = vld [vmem:[%s211 + $0x18] sm:$0xff]
        %v263 = vld [vmem:[%s211 + $0x20] sm:$0xf]
        %v264 = vld [vmem:[%s211 + $0x24] sm:$0xff]
        %v265 = vld [vmem:[%s211 + $0x2c] sm:$0xf]
        %v266 = vld [vmem:[%s211 + $0x30] sm:$0xff]
        %v267 = vld [vmem:[%s211 + $0x38] sm:$0xf]
        %v268 = vld [vmem:[%s211 + $0x3c] sm:$0xff]
        %v269 = vld [vmem:[%s211 + $0x44] sm:$0xf]
        %v270 = vld [vmem:[%s211 + $0x48] sm:$0xff]
        %v271 = vld [vmem:[%s211 + $0x50] sm:$0xf]
        %v272 = vld [vmem:[%s211 + $0x54] sm:$0xff]
        %v273 = vld [vmem:[%s211 + $0x5c] sm:$0xf]
        %v274 = vld [vmem:[%s211 + $0x60] sm:$0xff]
        %v275 = vld [vmem:[%s211 + $0x68] sm:$0xf]
        %v276 = vld [vmem:[%s211 + $0x6c] sm:$0xff]
        %v277 = vld [vmem:[%s211 + $0x74] sm:$0xf]
        %v278 = vld [vmem:[%s211 + $0x78] sm:$0xff]
        %v279 = vld [vmem:[%s211 + $0x80] sm:$0xf]
        %v280 = vld [vmem:[%s211 + $0x84] sm:$0xff]
        %v281 = vld [vmem:[%s211 + $0x8c] sm:$0xf]
        %v282 = vld [vmem:[%s211 + $0x90] sm:$0xff]
        %v283 = vld [vmem:[%s211 + $0x98] sm:$0xf]
        %v284 = vld [vmem:[%s211 + $0x9c] sm:$0xff]
        %v285 = vld [vmem:[%s211 + $0xa4] sm:$0xf]
        %v286 = vld [vmem:[%s211 + $0xa8] sm:$0xff]
        %v287 = vld [vmem:[%s211 + $0xb0] sm:$0xf]
        %v288 = vld [vmem:[%s211 + $0xb4] sm:$0xff]
        %v289 = vld [vmem:[%s211 + $0xbc] sm:$0xf]
        %v290 = vld [vmem:[%s211 + $0xc0] sm:$0xff]
        %v291 = vld [vmem:[%s211 + $0xc8] sm:$0xf]
        %v292 = vld [vmem:[%s211 + $0xcc] sm:$0xff]
        %v293 = vld [vmem:[%s211 + $0xd4] sm:$0xf]
        %v294 = vld [vmem:[%s211 + $0xd8] sm:$0xff]
        %v295 = vld [vmem:[%s211 + $0xe0] sm:$0xf]
        %v296 = vld [vmem:[%s211 + $0xe4] sm:$0xff]
        %v297 = vld [vmem:[%s211 + $0xec] sm:$0xf]
        %v298 = vld [vmem:[%s211 + $0xf0] sm:$0xff]
        %v299 = vld [vmem:[%s211 + $0xf8] sm:$0xf]
        %v300 = vld [vmem:[%s211 + $0xfc] sm:$0xff]
        %v301 = vld [vmem:[%s211 + $0x104] sm:$0xf]
        %v302 = vld [vmem:[%s211 + $0x108] sm:$0xff]
        %v303 = vld [vmem:[%s211 + $0x110] sm:$0xf]
        %v304 = vld [vmem:[%s211 + $0x114] sm:$0xff]
        %v305 = vld [vmem:[%s211 + $0x11c] sm:$0xf]
        %v306 = vld [vmem:[%s211 + $0x120] sm:$0xff]
        %v307 = vld [vmem:[%s211 + $0x128] sm:$0xf]
        %v308 = vld [vmem:[%s211 + $0x12c] sm:$0xff]
        %v309 = vld [vmem:[%s211 + $0x134] sm:$0xf]
        %v310 = vld [vmem:[%s211 + $0x138] sm:$0xff]
        %v311 = vld [vmem:[%s211 + $0x140] sm:$0xf]
        %v312 = vld [vmem:[%s211 + $0x144] sm:$0xff]
        %v313 = vld [vmem:[%s211 + $0x14c] sm:$0xf]
        %v314 = vld [vmem:[%s211 + $0x150] sm:$0xff]
        %v315 = vld [vmem:[%s211 + $0x158] sm:$0xf]
        %v316 = vld [vmem:[%s211 + $0x15c] sm:$0xff]
        %v317 = vld [vmem:[%s211 + $0x164] sm:$0xf]
        %v318 = vld [vmem:[%s211 + $0x168] sm:$0xff]
        %v319 = vld [vmem:[%s211 + $0x170] sm:$0xf]
        %v320 = vld [vmem:[%s211 + $0x174] sm:$0xff]
        %v321 = vld [vmem:[%s211 + $0x17c] sm:$0xf]
        %v322 = vld [vmem:[%s211 + $0x180] sm:$0xff]
        %v323 = vld [vmem:[%s211 + $0x188] sm:$0xf]
        %v324 = vld [vmem:[%s211 + $0x18c] sm:$0xff]
        %v325 = vld [vmem:[%s211 + $0x194] sm:$0xf]
        %v326 = vld [vmem:[%s211 + $0x198] sm:$0xff]
        %v327 = vld [vmem:[%s211 + $0x1a0] sm:$0xf]
        %v328 = vld [vmem:[%s211 + $0x1a4] sm:$0xff]
        %v329 = vld [vmem:[%s211 + $0x1ac] sm:$0xf]
        %v330 = vld [vmem:[%s211 + $0x1b0] sm:$0xff]
        %v331 = vld [vmem:[%s211 + $0x1b8] sm:$0xf]
        %v332 = vld [vmem:[%s211 + $0x1bc] sm:$0xff]
        %v333 = vld [vmem:[%s211 + $0x1c4] sm:$0xf]
        %v334 = vld [vmem:[%s211 + $0x1c8] sm:$0xff]
        %v335 = vld [vmem:[%s211 + $0x1d0] sm:$0xf]
        %v336 = vld [vmem:[%s211 + $0x1d4] sm:$0xff]
        %v337 = vld [vmem:[%s211 + $0x1dc] sm:$0xf]
        %v338 = vld [vmem:[%s211 + $0x1e0] sm:$0xff]
        %v339 = vld [vmem:[%s211 + $0x1e8] sm:$0xf]
        %v340 = vld [vmem:[%s211 + $0x1ec] sm:$0xff]
        %v341 = vld [vmem:[%s211 + $0x1f4] sm:$0xf]
        %v342 = vld [vmem:[%s211 + $0x1f8] sm:$0xff]
        %v343 = vld [vmem:[%s211 + $0x200] sm:$0xf]
        %v344 = vld [vmem:[%s211 + $0x204] sm:$0xff]
        %v345 = vld [vmem:[%s211 + $0x20c] sm:$0xf]
        %v346 = vld [vmem:[%s211 + $0x210] sm:$0xff]
        %v347 = vld [vmem:[%s211 + $0x218] sm:$0xf]
        %v348 = vld [vmem:[%s211 + $0x21c] sm:$0xff]
        %v349 = vld [vmem:[%s211 + $0x224] sm:$0xf]
        %v350 = vld [vmem:[%s211 + $0x228] sm:$0xff]
        %v351 = vld [vmem:[%s211 + $0x230] sm:$0xf]
        %v352 = vld [vmem:[%s211 + $0x234] sm:$0xff]
        %v353 = vld [vmem:[%s211 + $0x23c] sm:$0xf]
        %v354 = vld [vmem:[%s211 + $0x240] sm:$0xff]
        %v355 = vld [vmem:[%s211 + $0x248] sm:$0xf]
        %v356 = vld [vmem:[%s211 + $0x24c] sm:$0xff]
        %v357 = vld [vmem:[%s211 + $0x254] sm:$0xf]
        %v358 = vld [vmem:[%s211 + $0x258] sm:$0xff]
        %v359 = vld [vmem:[%s211 + $0x260] sm:$0xf]
        %v360 = vld [vmem:[%s211 + $0x264] sm:$0xff]
        %v361 = vld [vmem:[%s211 + $0x26c] sm:$0xf]
        %v362 = vld [vmem:[%s211 + $0x270] sm:$0xff]
        %v363 = vld [vmem:[%s211 + $0x278] sm:$0xf]
        %v364 = vld [vmem:[%s211 + $0x27c] sm:$0xff]
        %v365 = vld [vmem:[%s211 + $0x284] sm:$0xf]
        %v366 = vld [vmem:[%s211 + $0x288] sm:$0xff]
        %v367 = vld [vmem:[%s211 + $0x290] sm:$0xf]
        %v368 = vld [vmem:[%s211 + $0x294] sm:$0xff]
        %v369 = vld [vmem:[%s211 + $0x29c] sm:$0xf]
        %v370 = vld [vmem:[%s211 + $0x2a0] sm:$0xff]
        %v371 = vld [vmem:[%s211 + $0x2a8] sm:$0xf]
        %v372 = vld [vmem:[%s211 + $0x2ac] sm:$0xff]
        %v373 = vld [vmem:[%s211 + $0x2b4] sm:$0xf]
        %v374 = vld [vmem:[%s211 + $0x2b8] sm:$0xff]
        %v375 = vld [vmem:[%s211 + $0x2c0] sm:$0xf]
        %v376 = vld [vmem:[%s211 + $0x2c4] sm:$0xff]
        %v377 = vld [vmem:[%s211 + $0x2cc] sm:$0xf]
        %v378 = vld [vmem:[%s211 + $0x2d0] sm:$0xff]
        %v379 = vld [vmem:[%s211 + $0x2d8] sm:$0xf]
        %v380 = vld [vmem:[%s211 + $0x2dc] sm:$0xff]
        %v381 = vld [vmem:[%s211 + $0x2e4] sm:$0xf]
        %v382 = vld [vmem:[%s211 + $0x2e8] sm:$0xff]
        %v383 = vld [vmem:[%s211 + $0x2f0] sm:$0xf]
        %v384 = vld [vmem:[%s211 + $0x2f4] sm:$0xff]
        %v385 = vld [vmem:[%s211 + $0x2fc] sm:$0xf]
        %v386 = vld [vmem:[%s211 + $0x300] sm:$0xff]
        %v387 = vld [vmem:[%s211 + $0x308] sm:$0xf]
        %v388 = vld [vmem:[%s211 + $0x30c] sm:$0xff]
        %v389 = vld [vmem:[%s211 + $0x314] sm:$0xf]
        %v390 = vld [vmem:[%s211 + $0x318] sm:$0xff]
        %v391 = vld [vmem:[%s211 + $0x320] sm:$0xf]
        %v392 = vld [vmem:[%s211 + $0x324] sm:$0xff]
        %v393 = vld [vmem:[%s211 + $0x32c] sm:$0xf]
        %v394 = vld [vmem:[%s211 + $0x330] sm:$0xff]
        %v395 = vld [vmem:[%s211 + $0x338] sm:$0xf]
        %v396 = vld [vmem:[%s211 + $0x33c] sm:$0xff]
        %v397 = vld [vmem:[%s211 + $0x344] sm:$0xf]
        %v398 = vld [vmem:[%s211 + $0x348] sm:$0xff]
        %v399 = vld [vmem:[%s211 + $0x350] sm:$0xf]
        %v400 = vld [vmem:[%s211 + $0x354] sm:$0xff]
        %v401 = vld [vmem:[%s211 + $0x35c] sm:$0xf]
        %v402 = vld [vmem:[%s211 + $0x360] sm:$0xff]
        %v403 = vld [vmem:[%s211 + $0x368] sm:$0xf]
        %v404 = vld [vmem:[%s211 + $0x36c] sm:$0xff]
        %v405 = vld [vmem:[%s211 + $0x374] sm:$0xf]
        %v406 = vld [vmem:[%s211 + $0x378] sm:$0xff]
        %v407 = vld [vmem:[%s211 + $0x380] sm:$0xf]
        %v408 = vld [vmem:[%s211 + $0x384] sm:$0xff]
        %v409 = vld [vmem:[%s211 + $0x38c] sm:$0xf]
        %v410 = vld [vmem:[%s211 + $0x390] sm:$0xff]
        %v411 = vld [vmem:[%s211 + $0x398] sm:$0xf]
        %v412 = vld [vmem:[%s211 + $0x39c] sm:$0xff]
        %v413 = vld [vmem:[%s211 + $0x3a4] sm:$0xf]
        %v414 = vld [vmem:[%s211 + $0x3a8] sm:$0xff]
        %v415 = vld [vmem:[%s211 + $0x3b0] sm:$0xf]
        %v416 = vld [vmem:[%s211 + $0x3b4] sm:$0xff]
        %v417 = vld [vmem:[%s211 + $0x3bc] sm:$0xf]
        %v418 = vld [vmem:[%s211 + $0x3c0] sm:$0xff]
        %v419 = vld [vmem:[%s211 + $0x3c8] sm:$0xf]
        %v420 = vld [vmem:[%s211 + $0x3cc] sm:$0xff]
        %v421 = vld [vmem:[%s211 + $0x3d4] sm:$0xf]
        %v422 = vld [vmem:[%s211 + $0x3d8] sm:$0xff]
        %v423 = vld [vmem:[%s211 + $0x3e0] sm:$0xf]
        %v424 = vld [vmem:[%s211 + $0x3e4] sm:$0xff]
        %v425 = vld [vmem:[%s211 + $0x3ec] sm:$0xf]
        %v426 = vld [vmem:[%s211 + $0x3f0] sm:$0xff]
        %v427 = vld [vmem:[%s211 + $0x3f8] sm:$0xf]
        %v428 = vld [vmem:[%s211 + $0x3fc] sm:$0xff]
        %v429 = vld [vmem:[%s211 + $0x404] sm:$0xf]
        %v430 = vld [vmem:[%s211 + $0x408] sm:$0xff]
        %v431 = vld [vmem:[%s211 + $0x410] sm:$0xf]
        %v432 = vld [vmem:[%s211 + $0x414] sm:$0xff]
        %v433 = vld [vmem:[%s211 + $0x41c] sm:$0xf]
        %v434 = vld [vmem:[%s211 + $0x420] sm:$0xff]
        %v435 = vld [vmem:[%s211 + $0x428] sm:$0xf]
        %v436 = vld [vmem:[%s211 + $0x42c] sm:$0xff]
        %v437 = vld [vmem:[%s211 + $0x434] sm:$0xf]
        %v438 = vld [vmem:[%s211 + $0x438] sm:$0xff]
        %v439 = vld [vmem:[%s211 + $0x440] sm:$0xf]
        %v440 = vld [vmem:[%s211 + $0x444] sm:$0xff]
        %v441 = vld [vmem:[%s211 + $0x44c] sm:$0xf]
        %v442 = vld [vmem:[%s211 + $0x450] sm:$0xff]
        %v443 = vld [vmem:[%s211 + $0x458] sm:$0xf]
        %v444 = vld [vmem:[%s211 + $0x45c] sm:$0xff]
        %v445 = vld [vmem:[%s211 + $0x464] sm:$0xf]
        %v446 = vld [vmem:[%s211 + $0x468] sm:$0xff]
        %v447 = vld [vmem:[%s211 + $0x470] sm:$0xf]
        %v448 = vld [vmem:[%s211 + $0x474] sm:$0xff]
        %v449 = vld [vmem:[%s211 + $0x47c] sm:$0xf]
        %v450 = vld [vmem:[%s242] sm:$0x7]
        %v452 = vlaneseq
        %v453 = vshrl.u32 %v452, 7
        %v454 = vsub.s32 0, %v453
        %v455 = vrot.slane %v450, %v454
        %v456 = vlaneseq
        %v457 = vshrl.u32 %v456, 7
        %v458 = vsub.s32 1, %v457
        %v459 = vrot.slane %v450, %v458
        %v460 = vlaneseq
        %v461 = vshrl.u32 %v460, 7
        %v462 = vsub.s32 2, %v461
        %v463 = vrot.slane %v450, %v462
        %v659 = vunpack.c.l.b16 %v258
        %v660 = vunpack.c.h.b16 %v258
        %v661 = vunpack.c.l.b16 %v259
        %v662 = vunpack.c.l.b16 %v260
        %v663 = vunpack.c.h.b16 %v260
        %v664 = vunpack.c.l.b16 %v261
        %v665 = vunpack.c.l.b16 %v262
        %v666 = vunpack.c.h.b16 %v262
        %v667 = vunpack.c.l.b16 %v263
        %v668 = vunpack.c.l.b16 %v264
        %v669 = vunpack.c.h.b16 %v264
        %v670 = vunpack.c.l.b16 %v265
        %v671 = vunpack.c.l.b16 %v266
        %v672 = vunpack.c.h.b16 %v266
        %v673 = vunpack.c.l.b16 %v267
        %v674 = vunpack.c.l.b16 %v268
        %v675 = vunpack.c.h.b16 %v268
        %v676 = vunpack.c.l.b16 %v269
        %v677 = vunpack.c.l.b16 %v270
        %v678 = vunpack.c.h.b16 %v270
        %v679 = vunpack.c.l.b16 %v271
        %v680 = vunpack.c.l.b16 %v272
        %v681 = vunpack.c.h.b16 %v272
        %v682 = vunpack.c.l.b16 %v273
        %v683 = vunpack.c.l.b16 %v274
        %v684 = vunpack.c.h.b16 %v274
        %v685 = vunpack.c.l.b16 %v275
        %v686 = vunpack.c.l.b16 %v276
        %v687 = vunpack.c.h.b16 %v276
        %v688 = vunpack.c.l.b16 %v277
        %v689 = vunpack.c.l.b16 %v278
        %v690 = vunpack.c.h.b16 %v278
        %v691 = vunpack.c.l.b16 %v279
        %v692 = vunpack.c.l.b16 %v280
        %v693 = vunpack.c.h.b16 %v280
        %v694 = vunpack.c.l.b16 %v281
        %v695 = vunpack.c.l.b16 %v282
        %v696 = vunpack.c.h.b16 %v282
        %v697 = vunpack.c.l.b16 %v283
        %v698 = vunpack.c.l.b16 %v284
        %v699 = vunpack.c.h.b16 %v284
        %v700 = vunpack.c.l.b16 %v285
        %v701 = vunpack.c.l.b16 %v286
        %v702 = vunpack.c.h.b16 %v286
        %v703 = vunpack.c.l.b16 %v287
        %v704 = vunpack.c.l.b16 %v288
        %v705 = vunpack.c.h.b16 %v288
        %v706 = vunpack.c.l.b16 %v289
        %v707 = vunpack.c.l.b16 %v290
        %v708 = vunpack.c.h.b16 %v290
        %v709 = vunpack.c.l.b16 %v291
        %v710 = vunpack.c.l.b16 %v292
        %v711 = vunpack.c.h.b16 %v292
        %v712 = vunpack.c.l.b16 %v293
        %v713 = vunpack.c.l.b16 %v294
        %v714 = vunpack.c.h.b16 %v294
        %v715 = vunpack.c.l.b16 %v295
        %v716 = vunpack.c.l.b16 %v296
        %v717 = vunpack.c.h.b16 %v296
        %v718 = vunpack.c.l.b16 %v297
        %v719 = vunpack.c.l.b16 %v298
        %v720 = vunpack.c.h.b16 %v298
        %v721 = vunpack.c.l.b16 %v299
        %v722 = vunpack.c.l.b16 %v300
        %v723 = vunpack.c.h.b16 %v300
        %v724 = vunpack.c.l.b16 %v301
        %v725 = vunpack.c.l.b16 %v302
        %v726 = vunpack.c.h.b16 %v302
        %v727 = vunpack.c.l.b16 %v303
        %v728 = vunpack.c.l.b16 %v304
        %v729 = vunpack.c.h.b16 %v304
        %v730 = vunpack.c.l.b16 %v305
        %v731 = vunpack.c.l.b16 %v306
        %v732 = vunpack.c.h.b16 %v306
        %v733 = vunpack.c.l.b16 %v307
        %v734 = vunpack.c.l.b16 %v308
        %v735 = vunpack.c.h.b16 %v308
        %v736 = vunpack.c.l.b16 %v309
        %v737 = vunpack.c.l.b16 %v310
        %v738 = vunpack.c.h.b16 %v310
        %v739 = vunpack.c.l.b16 %v311
        %v740 = vunpack.c.l.b16 %v312
        %v741 = vunpack.c.h.b16 %v312
        %v742 = vunpack.c.l.b16 %v313
        %v743 = vunpack.c.l.b16 %v314
        %v744 = vunpack.c.h.b16 %v314
        %v745 = vunpack.c.l.b16 %v315
        %v746 = vunpack.c.l.b16 %v316
        %v747 = vunpack.c.h.b16 %v316
        %v748 = vunpack.c.l.b16 %v317
        %v749 = vunpack.c.l.b16 %v318
        %v750 = vunpack.c.h.b16 %v318
        %v751 = vunpack.c.l.b16 %v319
        %v752 = vunpack.c.l.b16 %v320
        %v753 = vunpack.c.h.b16 %v320
        %v754 = vunpack.c.l.b16 %v321
        %v755 = vunpack.c.l.b16 %v322
        %v756 = vunpack.c.h.b16 %v322
        %v757 = vunpack.c.l.b16 %v323
        %v758 = vunpack.c.l.b16 %v324
        %v759 = vunpack.c.h.b16 %v324
        %v760 = vunpack.c.l.b16 %v325
        %v761 = vunpack.c.l.b16 %v326
        %v762 = vunpack.c.h.b16 %v326
        %v763 = vunpack.c.l.b16 %v327
        %v764 = vunpack.c.l.b16 %v328
        %v765 = vunpack.c.h.b16 %v328
        %v766 = vunpack.c.l.b16 %v329
        %v767 = vunpack.c.l.b16 %v330
        %v768 = vunpack.c.h.b16 %v330
        %v769 = vunpack.c.l.b16 %v331
        %v770 = vunpack.c.l.b16 %v332
        %v771 = vunpack.c.h.b16 %v332
        %v772 = vunpack.c.l.b16 %v333
        %v773 = vunpack.c.l.b16 %v334
        %v774 = vunpack.c.h.b16 %v334
        %v775 = vunpack.c.l.b16 %v335
        %v776 = vunpack.c.l.b16 %v336
        %v777 = vunpack.c.h.b16 %v336
        %v778 = vunpack.c.l.b16 %v337
        %v779 = vunpack.c.l.b16 %v338
        %v780 = vunpack.c.h.b16 %v338
        %v781 = vunpack.c.l.b16 %v339
        %v782 = vunpack.c.l.b16 %v340
        %v783 = vunpack.c.h.b16 %v340
        %v784 = vunpack.c.l.b16 %v341
        %v785 = vunpack.c.l.b16 %v342
        %v786 = vunpack.c.h.b16 %v342
        %v787 = vunpack.c.l.b16 %v343
        %v788 = vunpack.c.l.b16 %v344
        %v789 = vunpack.c.h.b16 %v344
        %v790 = vunpack.c.l.b16 %v345
        %v791 = vunpack.c.l.b16 %v346
        %v792 = vunpack.c.h.b16 %v346
        %v793 = vunpack.c.l.b16 %v347
        %v794 = vunpack.c.l.b16 %v348
        %v795 = vunpack.c.h.b16 %v348
        %v796 = vunpack.c.l.b16 %v349
        %v797 = vunpack.c.l.b16 %v350
        %v798 = vunpack.c.h.b16 %v350
        %v799 = vunpack.c.l.b16 %v351
        %v800 = vunpack.c.l.b16 %v352
        %v801 = vunpack.c.h.b16 %v352
        %v802 = vunpack.c.l.b16 %v353
        %v803 = vunpack.c.l.b16 %v354
        %v804 = vunpack.c.h.b16 %v354
        %v805 = vunpack.c.l.b16 %v355
        %v806 = vunpack.c.l.b16 %v356
        %v807 = vunpack.c.h.b16 %v356
        %v808 = vunpack.c.l.b16 %v357
        %v809 = vunpack.c.l.b16 %v358
        %v810 = vunpack.c.h.b16 %v358
        %v811 = vunpack.c.l.b16 %v359
        %v812 = vunpack.c.l.b16 %v360
        %v813 = vunpack.c.h.b16 %v360
        %v814 = vunpack.c.l.b16 %v361
        %v815 = vunpack.c.l.b16 %v362
        %v816 = vunpack.c.h.b16 %v362
        %v817 = vunpack.c.l.b16 %v363
        %v818 = vunpack.c.l.b16 %v364
        %v819 = vunpack.c.h.b16 %v364
        %v820 = vunpack.c.l.b16 %v365
        %v821 = vunpack.c.l.b16 %v366
        %v822 = vunpack.c.h.b16 %v366
        %v823 = vunpack.c.l.b16 %v367
        %v824 = vunpack.c.l.b16 %v368
        %v825 = vunpack.c.h.b16 %v368
        %v826 = vunpack.c.l.b16 %v369
        %v827 = vunpack.c.l.b16 %v370
        %v828 = vunpack.c.h.b16 %v370
        %v829 = vunpack.c.l.b16 %v371
        %v830 = vunpack.c.l.b16 %v372
        %v831 = vunpack.c.h.b16 %v372
        %v832 = vunpack.c.l.b16 %v373
        %v833 = vunpack.c.l.b16 %v374
        %v834 = vunpack.c.h.b16 %v374
        %v835 = vunpack.c.l.b16 %v375
        %v836 = vunpack.c.l.b16 %v376
        %v837 = vunpack.c.h.b16 %v376
        %v838 = vunpack.c.l.b16 %v377
        %v839 = vunpack.c.l.b16 %v378
        %v840 = vunpack.c.h.b16 %v378
        %v841 = vunpack.c.l.b16 %v379
        %v842 = vunpack.c.l.b16 %v380
        %v843 = vunpack.c.h.b16 %v380
        %v844 = vunpack.c.l.b16 %v381
        %v845 = vunpack.c.l.b16 %v382
        %v846 = vunpack.c.h.b16 %v382
        %v847 = vunpack.c.l.b16 %v383
        %v848 = vunpack.c.l.b16 %v384
        %v849 = vunpack.c.h.b16 %v384
        %v850 = vunpack.c.l.b16 %v385
        %v851 = vunpack.c.l.b16 %v386
        %v852 = vunpack.c.h.b16 %v386
        %v853 = vunpack.c.l.b16 %v387
        %v854 = vunpack.c.l.b16 %v388
        %v855 = vunpack.c.h.b16 %v388
        %v856 = vunpack.c.l.b16 %v389
        %v857 = vunpack.c.l.b16 %v390
        %v858 = vunpack.c.h.b16 %v390
        %v859 = vunpack.c.l.b16 %v391
        %v860 = vunpack.c.l.b16 %v392
        %v861 = vunpack.c.h.b16 %v392
        %v862 = vunpack.c.l.b16 %v393
        %v863 = vunpack.c.l.b16 %v394
        %v864 = vunpack.c.h.b16 %v394
        %v865 = vunpack.c.l.b16 %v395
        %v866 = vunpack.c.l.b16 %v396
        %v867 = vunpack.c.h.b16 %v396
        %v868 = vunpack.c.l.b16 %v397
        %v869 = vunpack.c.l.b16 %v398
        %v870 = vunpack.c.h.b16 %v398
        %v871 = vunpack.c.l.b16 %v399
        %v872 = vunpack.c.l.b16 %v400
        %v873 = vunpack.c.h.b16 %v400
        %v874 = vunpack.c.l.b16 %v401
        %v875 = vunpack.c.l.b16 %v402
        %v876 = vunpack.c.h.b16 %v402
        %v877 = vunpack.c.l.b16 %v403
        %v878 = vunpack.c.l.b16 %v404
        %v879 = vunpack.c.h.b16 %v404
        %v880 = vunpack.c.l.b16 %v405
        %v881 = vunpack.c.l.b16 %v406
        %v882 = vunpack.c.h.b16 %v406
        %v883 = vunpack.c.l.b16 %v407
        %v884 = vunpack.c.l.b16 %v408
        %v885 = vunpack.c.h.b16 %v408
        %v886 = vunpack.c.l.b16 %v409
        %v887 = vunpack.c.l.b16 %v410
        %v888 = vunpack.c.h.b16 %v410
        %v889 = vunpack.c.l.b16 %v411
        %v890 = vunpack.c.l.b16 %v412
        %v891 = vunpack.c.h.b16 %v412
        %v892 = vunpack.c.l.b16 %v413
        %v893 = vunpack.c.l.b16 %v414
        %v894 = vunpack.c.h.b16 %v414
        %v895 = vunpack.c.l.b16 %v415
        %v896 = vunpack.c.l.b16 %v416
        %v897 = vunpack.c.h.b16 %v416
        %v898 = vunpack.c.l.b16 %v417
        %v899 = vunpack.c.l.b16 %v418
        %v900 = vunpack.c.h.b16 %v418
        %v901 = vunpack.c.l.b16 %v419
        %v902 = vunpack.c.l.b16 %v420
        %v903 = vunpack.c.h.b16 %v420
        %v904 = vunpack.c.l.b16 %v421
        %v905 = vunpack.c.l.b16 %v422
        %v906 = vunpack.c.h.b16 %v422
        %v907 = vunpack.c.l.b16 %v423
        %v908 = vunpack.c.l.b16 %v424
        %v909 = vunpack.c.h.b16 %v424
        %v910 = vunpack.c.l.b16 %v425
        %v911 = vunpack.c.l.b16 %v426
        %v912 = vunpack.c.h.b16 %v426
        %v913 = vunpack.c.l.b16 %v427
        %v914 = vunpack.c.l.b16 %v428
        %v915 = vunpack.c.h.b16 %v428
        %v916 = vunpack.c.l.b16 %v429
        %v917 = vunpack.c.l.b16 %v430
        %v918 = vunpack.c.h.b16 %v430
        %v919 = vunpack.c.l.b16 %v431
        %v920 = vunpack.c.l.b16 %v432
        %v921 = vunpack.c.h.b16 %v432
        %v922 = vunpack.c.l.b16 %v433
        %v923 = vunpack.c.l.b16 %v434
        %v924 = vunpack.c.h.b16 %v434
        %v925 = vunpack.c.l.b16 %v435
        %v926 = vunpack.c.l.b16 %v436
        %v927 = vunpack.c.h.b16 %v436
        %v928 = vunpack.c.l.b16 %v437
        %v929 = vunpack.c.l.b16 %v438
        %v930 = vunpack.c.h.b16 %v438
        %v931 = vunpack.c.l.b16 %v439
        %v932 = vunpack.c.l.b16 %v440
        %v933 = vunpack.c.h.b16 %v440
        %v934 = vunpack.c.l.b16 %v441
        %v935 = vunpack.c.l.b16 %v442
        %v936 = vunpack.c.h.b16 %v442
        %v937 = vunpack.c.l.b16 %v443
        %v938 = vunpack.c.l.b16 %v444
        %v939 = vunpack.c.h.b16 %v444
        %v940 = vunpack.c.l.b16 %v445
        %v941 = vunpack.c.l.b16 %v446
        %v942 = vunpack.c.h.b16 %v446
        %v943 = vunpack.c.l.b16 %v447
        %v944 = vunpack.c.l.b16 %v448
        %v945 = vunpack.c.h.b16 %v448
        %v946 = vunpack.c.l.b16 %v449
        %v947 = vpack.c.b16 %v662, %v659
        %v948 = vpack.c.b16 %v663, %v660
        %v949 = vpack.c.b16 %v664, %v661
        %v950 = vpack.c.b16 %v668, %v665
        %v951 = vpack.c.b16 %v669, %v666
        %v952 = vpack.c.b16 %v670, %v667
        %v953 = vpack.c.b16 %v674, %v671
        %v954 = vpack.c.b16 %v675, %v672
        %v955 = vpack.c.b16 %v676, %v673
        %v956 = vpack.c.b16 %v680, %v677
        %v957 = vpack.c.b16 %v681, %v678
        %v958 = vpack.c.b16 %v682, %v679
        %v959 = vpack.c.b16 %v686, %v683
        %v960 = vpack.c.b16 %v687, %v684
        %v961 = vpack.c.b16 %v688, %v685
        %v962 = vpack.c.b16 %v692, %v689
        %v963 = vpack.c.b16 %v693, %v690
        %v964 = vpack.c.b16 %v694, %v691
        %v965 = vpack.c.b16 %v698, %v695
        %v966 = vpack.c.b16 %v699, %v696
        %v967 = vpack.c.b16 %v700, %v697
        %v968 = vpack.c.b16 %v704, %v701
        %v969 = vpack.c.b16 %v705, %v702
        %v970 = vpack.c.b16 %v706, %v703
        %v971 = vpack.c.b16 %v710, %v707
        %v972 = vpack.c.b16 %v711, %v708
        %v973 = vpack.c.b16 %v712, %v709
        %v974 = vpack.c.b16 %v716, %v713
        %v975 = vpack.c.b16 %v717, %v714
        %v976 = vpack.c.b16 %v718, %v715
        %v977 = vpack.c.b16 %v722, %v719
        %v978 = vpack.c.b16 %v723, %v720
        %v979 = vpack.c.b16 %v724, %v721
        %v980 = vpack.c.b16 %v728, %v725
        %v981 = vpack.c.b16 %v729, %v726
        %v982 = vpack.c.b16 %v730, %v727
        %v983 = vpack.c.b16 %v734, %v731
        %v984 = vpack.c.b16 %v735, %v732
        %v985 = vpack.c.b16 %v736, %v733
        %v986 = vpack.c.b16 %v740, %v737
        %v987 = vpack.c.b16 %v741, %v738
        %v988 = vpack.c.b16 %v742, %v739
        %v989 = vpack.c.b16 %v746, %v743
        %v990 = vpack.c.b16 %v747, %v744
        %v991 = vpack.c.b16 %v748, %v745
        %v992 = vpack.c.b16 %v752, %v749
        %v993 = vpack.c.b16 %v753, %v750
        %v994 = vpack.c.b16 %v754, %v751
        %v995 = vpack.c.b16 %v758, %v755
        %v996 = vpack.c.b16 %v759, %v756
        %v997 = vpack.c.b16 %v760, %v757
        %v998 = vpack.c.b16 %v764, %v761
        %v999 = vpack.c.b16 %v765, %v762
        %v1000 = vpack.c.b16 %v766, %v763
        %v1001 = vpack.c.b16 %v770, %v767
        %v1002 = vpack.c.b16 %v771, %v768
        %v1003 = vpack.c.b16 %v772, %v769
        %v1004 = vpack.c.b16 %v776, %v773
        %v1005 = vpack.c.b16 %v777, %v774
        %v1006 = vpack.c.b16 %v778, %v775
        %v1007 = vpack.c.b16 %v782, %v779
        %v1008 = vpack.c.b16 %v783, %v780
        %v1009 = vpack.c.b16 %v784, %v781
        %v1010 = vpack.c.b16 %v788, %v785
        %v1011 = vpack.c.b16 %v789, %v786
        %v1012 = vpack.c.b16 %v790, %v787
        %v1013 = vpack.c.b16 %v794, %v791
        %v1014 = vpack.c.b16 %v795, %v792
        %v1015 = vpack.c.b16 %v796, %v793
        %v1016 = vpack.c.b16 %v800, %v797
        %v1017 = vpack.c.b16 %v801, %v798
        %v1018 = vpack.c.b16 %v802, %v799
        %v1019 = vpack.c.b16 %v806, %v803
        %v1020 = vpack.c.b16 %v807, %v804
        %v1021 = vpack.c.b16 %v808, %v805
        %v1022 = vpack.c.b16 %v812, %v809
        %v1023 = vpack.c.b16 %v813, %v810
        %v1024 = vpack.c.b16 %v814, %v811
        %v1025 = vpack.c.b16 %v818, %v815
        %v1026 = vpack.c.b16 %v819, %v816
        %v1027 = vpack.c.b16 %v820, %v817
        %v1028 = vpack.c.b16 %v824, %v821
        %v1029 = vpack.c.b16 %v825, %v822
        %v1030 = vpack.c.b16 %v826, %v823
        %v1031 = vpack.c.b16 %v830, %v827
        %v1032 = vpack.c.b16 %v831, %v828
        %v1033 = vpack.c.b16 %v832, %v829
        %v1034 = vpack.c.b16 %v836, %v833
        %v1035 = vpack.c.b16 %v837, %v834
        %v1036 = vpack.c.b16 %v838, %v835
        %v1037 = vpack.c.b16 %v842, %v839
        %v1038 = vpack.c.b16 %v843, %v840
        %v1039 = vpack.c.b16 %v844, %v841
        %v1040 = vpack.c.b16 %v848, %v845
        %v1041 = vpack.c.b16 %v849, %v846
        %v1042 = vpack.c.b16 %v850, %v847
        %v1043 = vpack.c.b16 %v854, %v851
        %v1044 = vpack.c.b16 %v855, %v852
        %v1045 = vpack.c.b16 %v856, %v853
        %v1046 = vpack.c.b16 %v860, %v857
        %v1047 = vpack.c.b16 %v861, %v858
        %v1048 = vpack.c.b16 %v862, %v859
        %v1049 = vpack.c.b16 %v866, %v863
        %v1050 = vpack.c.b16 %v867, %v864
        %v1051 = vpack.c.b16 %v868, %v865
        %v1052 = vpack.c.b16 %v872, %v869
        %v1053 = vpack.c.b16 %v873, %v870
        %v1054 = vpack.c.b16 %v874, %v871
        %v1055 = vpack.c.b16 %v878, %v875
        %v1056 = vpack.c.b16 %v879, %v876
        %v1057 = vpack.c.b16 %v880, %v877
        %v1058 = vpack.c.b16 %v884, %v881
        %v1059 = vpack.c.b16 %v885, %v882
        %v1060 = vpack.c.b16 %v886, %v883
        %v1061 = vpack.c.b16 %v890, %v887
        %v1062 = vpack.c.b16 %v891, %v888
        %v1063 = vpack.c.b16 %v892, %v889
        %v1064 = vpack.c.b16 %v896, %v893
        %v1065 = vpack.c.b16 %v897, %v894
        %v1066 = vpack.c.b16 %v898, %v895
        %v1067 = vpack.c.b16 %v902, %v899
        %v1068 = vpack.c.b16 %v903, %v900
        %v1069 = vpack.c.b16 %v904, %v901
        %v1070 = vpack.c.b16 %v908, %v905
        %v1071 = vpack.c.b16 %v909, %v906
        %v1072 = vpack.c.b16 %v910, %v907
        %v1073 = vpack.c.b16 %v914, %v911
        %v1074 = vpack.c.b16 %v915, %v912
        %v1075 = vpack.c.b16 %v916, %v913
        %v1076 = vpack.c.b16 %v920, %v917
        %v1077 = vpack.c.b16 %v921, %v918
        %v1078 = vpack.c.b16 %v922, %v919
        %v1079 = vpack.c.b16 %v926, %v923
        %v1080 = vpack.c.b16 %v927, %v924
        %v1081 = vpack.c.b16 %v928, %v925
        %v1082 = vpack.c.b16 %v932, %v929
        %v1083 = vpack.c.b16 %v933, %v930
        %v1084 = vpack.c.b16 %v934, %v931
        %v1085 = vpack.c.b16 %v938, %v935
        %v1086 = vpack.c.b16 %v939, %v936
        %v1087 = vpack.c.b16 %v940, %v937
        %v1088 = vpack.c.b16 %v944, %v941
        %v1089 = vpack.c.b16 %v945, %v942
        %v1090 = vpack.c.b16 %v946, %v943
        %1235 = vmatprep.subr.bf16.mxu0 %v948
        %1236 = vmatpush1.bf16.msra.mxu0 %v947
        %1237 = vmatprep.subr.bf16.mxu0 %v951
        %1238 = vmatpush1.bf16.msra.mxu0 %v950
        %1239 = vmatprep.subr.bf16.mxu0 %v954
        %1240 = vmatpush1.bf16.msra.mxu0 %v953
        %1241 = vmatprep.subr.bf16.mxu0 %v957
        %1242 = vmatpush1.bf16.msra.mxu0 %v956
        %1243 = vmatprep.subr.bf16.mxu0 %v960
        %1244 = vmatpush1.bf16.msra.mxu0 %v959
        %1245 = vmatprep.subr.bf16.mxu0 %v963
        %1246 = vmatpush1.bf16.msra.mxu0 %v962
        %1247 = vmatprep.subr.bf16.mxu0 %v966
        %1248 = vmatpush1.bf16.msra.mxu0 %v965
        %1249 = vmatprep.subr.bf16.mxu0 %v969
        %1250 = vmatpush1.bf16.msra.mxu0 %v968
        %1251 = vmatprep.subr.bf16.mxu0 %v972
        %1252 = vmatpush1.bf16.msra.mxu0 %v971
        %1253 = vmatprep.subr.bf16.mxu0 %v975
        %1254 = vmatpush1.bf16.msra.mxu0 %v974
        %1255 = vmatprep.subr.bf16.mxu0 %v978
        %1256 = vmatpush1.bf16.msra.mxu0 %v977
        %1257 = vmatprep.subr.bf16.mxu0 %v981
        %1258 = vmatpush1.bf16.msra.mxu0 %v980
        %1259 = vmatprep.subr.bf16.mxu0 %v984
        %1260 = vmatpush1.bf16.msra.mxu0 %v983
        %1261 = vmatprep.subr.bf16.mxu0 %v987
        %1262 = vmatpush1.bf16.msra.mxu0 %v986
        %1263 = vmatprep.subr.bf16.mxu0 %v990
        %1264 = vmatpush1.bf16.msra.mxu0 %v989
        %1265 = vmatprep.subr.bf16.mxu0 %v993
        %1266 = vmatpush1.bf16.msra.mxu0 %v992
        %1267 = vmatprep.mubr.bf16.mxu0 %v253
        %1268 = vmatmul.mubr.bf16.gmra.mrb[0].mxu0 %v252
        %v1269 = vpop.f32.mrb[0].mxu0
        %v1270 = vadd.f32 %v455, %v1269
        %v1271 = vpop.f32.mrb[0].mxu0
        %v1272 = vadd.f32 %v459, %v1271
        %v1273 = vpop.f32.mrb[0].mxu0
        %v1274 = vpop.f32.mrb[0].mxu0
        %1275 = vdwg.mxu0
        %1276 = vmatprep.subr.bf16.mxu0 %v996
        %1277 = vmatpush1.bf16.msra.mxu0 %v995
        %1278 = vmatprep.subr.bf16.mxu0 %v999
        %1279 = vmatpush1.bf16.msra.mxu0 %v998
        %1280 = vmatprep.subr.bf16.mxu0 %v1002
        %1281 = vmatpush1.bf16.msra.mxu0 %v1001
        %1282 = vmatprep.subr.bf16.mxu0 %v1005
        %1283 = vmatpush1.bf16.msra.mxu0 %v1004
        %1284 = vmatprep.subr.bf16.mxu0 %v1008
        %1285 = vmatpush1.bf16.msra.mxu0 %v1007
        %1286 = vmatprep.subr.bf16.mxu0 %v1011
        %1287 = vmatpush1.bf16.msra.mxu0 %v1010
        %1288 = vmatprep.subr.bf16.mxu0 %v1014
        %1289 = vmatpush1.bf16.msra.mxu0 %v1013
        %1290 = vmatprep.subr.bf16.mxu0 %v1017
        %1291 = vmatpush1.bf16.msra.mxu0 %v1016
        %1292 = vmatprep.subr.bf16.mxu0 %v1020
        %1293 = vmatpush1.bf16.msra.mxu0 %v1019
        %1294 = vmatprep.subr.bf16.mxu0 %v1023
        %1295 = vmatpush1.bf16.msra.mxu0 %v1022
        %1296 = vmatprep.subr.bf16.mxu0 %v1026
        %1297 = vmatpush1.bf16.msra.mxu0 %v1025
        %1298 = vmatprep.subr.bf16.mxu0 %v1029
        %1299 = vmatpush1.bf16.msra.mxu0 %v1028
        %1300 = vmatprep.subr.bf16.mxu0 %v1032
        %1301 = vmatpush1.bf16.msra.mxu0 %v1031
        %1302 = vmatprep.subr.bf16.mxu0 %v1035
        %1303 = vmatpush1.bf16.msra.mxu0 %v1034
        %1304 = vmatprep.subr.bf16.mxu0 %v1038
        %1305 = vmatpush1.bf16.msra.mxu0 %v1037
        %1306 = vmatprep.subr.bf16.mxu0 %v1041
        %1307 = vmatpush1.bf16.msra.mxu0 %v1040
        %1308 = vmatprep.mubr.bf16.mxu0 %v255
        %1309 = vmatmul.mubr.bf16.gmra.mrb[0].mxu0 %v254
        %v1310 = vpop.f32.mrb[0].mxu0
        %v1311 = vadd.f32 %v1270, %v1310
        %v1312 = vpop.f32.mrb[0].mxu0
        %v1313 = vadd.f32 %v1272, %v1312
        %v1314 = vpop.f32.mrb[0].mxu0
        %v1315 = vpop.f32.mrb[0].mxu0
        %1316 = vdwg.mxu0
        %1317 = vmatprep.subr.bf16.mxu0 %v1044
        %1318 = vmatpush1.bf16.msra.mxu0 %v1043
        %1319 = vmatprep.subr.bf16.mxu0 %v1047
        %1320 = vmatpush1.bf16.msra.mxu0 %v1046
        %1321 = vmatprep.subr.bf16.mxu0 %v1050
        %1322 = vmatpush1.bf16.msra.mxu0 %v1049
        %1323 = vmatprep.subr.bf16.mxu0 %v1053
        %1324 = vmatpush1.bf16.msra.mxu0 %v1052
        %1325 = vmatprep.subr.bf16.mxu0 %v1056
        %1326 = vmatpush1.bf16.msra.mxu0 %v1055
        %1327 = vmatprep.subr.bf16.mxu0 %v1059
        %1328 = vmatpush1.bf16.msra.mxu0 %v1058
        %1329 = vmatprep.subr.bf16.mxu0 %v1062
        %1330 = vmatpush1.bf16.msra.mxu0 %v1061
        %1331 = vmatprep.subr.bf16.mxu0 %v1065
        %1332 = vmatpush1.bf16.msra.mxu0 %v1064
        %1333 = vmatprep.subr.bf16.mxu0 %v1068
        %1334 = vmatpush1.bf16.msra.mxu0 %v1067
        %1335 = vmatprep.subr.bf16.mxu0 %v1071
        %1336 = vmatpush1.bf16.msra.mxu0 %v1070
        %1337 = vmatprep.subr.bf16.mxu0 %v1074
        %1338 = vmatpush1.bf16.msra.mxu0 %v1073
        %1339 = vmatprep.subr.bf16.mxu0 %v1077
        %1340 = vmatpush1.bf16.msra.mxu0 %v1076
        %1341 = vmatprep.subr.bf16.mxu0 %v1080
        %1342 = vmatpush1.bf16.msra.mxu0 %v1079
        %1343 = vmatprep.subr.bf16.mxu0 %v1083
        %1344 = vmatpush1.bf16.msra.mxu0 %v1082
        %1345 = vmatprep.subr.bf16.mxu0 %v1086
        %1346 = vmatpush1.bf16.msra.mxu0 %v1085
        %1347 = vmatprep.subr.bf16.mxu0 %v1089
        %1348 = vmatpush1.bf16.msra.mxu0 %v1088
        %1349 = vmatprep.mubr.bf16.mxu0 %v257
        %1350 = vmatmul.mubr.bf16.gmra.mrb[0].mxu0 %v256
        %v1351 = vpop.f32.mrb[0].mxu0
        %v1352 = vadd.f32 %v1311, %v1351
        %v1353 = vpop.f32.mrb[0].mxu0
        %v1354 = vadd.f32 %v1313, %v1353
        %v1355 = vpop.f32.mrb[0].mxu0
        %v1356 = vpop.f32.mrb[0].mxu0
        %1357 = vdwg.mxu0
        %1358 = vmatprep.subr.bf16.mxu0 0
        %1359 = vmatpush1.bf16.msra.mxu0 %v949
        %1360 = vmatprep.subr.bf16.mxu0 0
        %1361 = vmatpush1.bf16.msra.mxu0 %v952
        %1362 = vmatprep.subr.bf16.mxu0 0
        %1363 = vmatpush1.bf16.msra.mxu0 %v955
        %1364 = vmatprep.subr.bf16.mxu0 0
        %1365 = vmatpush1.bf16.msra.mxu0 %v958
        %1366 = vmatprep.subr.bf16.mxu0 0
        %1367 = vmatpush1.bf16.msra.mxu0 %v961
        %1368 = vmatprep.subr.bf16.mxu0 0
        %1369 = vmatpush1.bf16.msra.mxu0 %v964
        %1370 = vmatprep.subr.bf16.mxu0 0
        %1371 = vmatpush1.bf16.msra.mxu0 %v967
        %1372 = vmatprep.subr.bf16.mxu0 0
        %1373 = vmatpush1.bf16.msra.mxu0 %v970
        %1374 = vmatprep.subr.bf16.mxu0 0
        %1375 = vmatpush1.bf16.msra.mxu0 %v973
        %1376 = vmatprep.subr.bf16.mxu0 0
        %1377 = vmatpush1.bf16.msra.mxu0 %v976
        %1378 = vmatprep.subr.bf16.mxu0 0
        %1379 = vmatpush1.bf16.msra.mxu0 %v979
        %1380 = vmatprep.subr.bf16.mxu0 0
        %1381 = vmatpush1.bf16.msra.mxu0 %v982
        %1382 = vmatprep.subr.bf16.mxu0 0
        %1383 = vmatpush1.bf16.msra.mxu0 %v985
        %1384 = vmatprep.subr.bf16.mxu0 0
        %1385 = vmatpush1.bf16.msra.mxu0 %v988
        %1386 = vmatprep.subr.bf16.mxu0 0
        %1387 = vmatpush1.bf16.msra.mxu0 %v991
        %1388 = vmatprep.subr.bf16.mxu0 0
        %1389 = vmatpush1.bf16.msra.mxu0 %v994
        %1390 = vmatprep.mubr.bf16.mxu0 %v253
        %1391 = vmatmul.mubr.bf16.gmra.mrb[0].mxu0 %v252
        %v1392 = vpop.f32.mrb[0].mxu0
        %v1393 = vadd.f32 %v463, %v1392
        %v1394 = vpop.f32.mrb[0].mxu0
        %v1395 = vpop.f32.mrb[0].mxu0
        %v1396 = vpop.f32.mrb[0].mxu0
        %1397 = vdwg.mxu0
        %1398 = vmatprep.subr.bf16.mxu0 0
        %1399 = vmatpush1.bf16.msra.mxu0 %v997
        %1400 = vmatprep.subr.bf16.mxu0 0
        %1401 = vmatpush1.bf16.msra.mxu0 %v1000
        %1402 = vmatprep.subr.bf16.mxu0 0
        %1403 = vmatpush1.bf16.msra.mxu0 %v1003
        %1404 = vmatprep.subr.bf16.mxu0 0
        %1405 = vmatpush1.bf16.msra.mxu0 %v1006
        %1406 = vmatprep.subr.bf16.mxu0 0
        %1407 = vmatpush1.bf16.msra.mxu0 %v1009
        %1408 = vmatprep.subr.bf16.mxu0 0
        %1409 = vmatpush1.bf16.msra.mxu0 %v1012
        %1410 = vmatprep.subr.bf16.mxu0 0
        %1411 = vmatpush1.bf16.msra.mxu0 %v1015
        %1412 = vmatprep.subr.bf16.mxu0 0
        %1413 = vmatpush1.bf16.msra.mxu0 %v1018
        %1414 = vmatprep.subr.bf16.mxu0 0
        %1415 = vmatpush1.bf16.msra.mxu0 %v1021
        %1416 = vmatprep.subr.bf16.mxu0 0
        %1417 = vmatpush1.bf16.msra.mxu0 %v1024
        %1418 = vmatprep.subr.bf16.mxu0 0
        %1419 = vmatpush1.bf16.msra.mxu0 %v1027
        %1420 = vmatprep.subr.bf16.mxu0 0
        %1421 = vmatpush1.bf16.msra.mxu0 %v1030
        %1422 = vmatprep.subr.bf16.mxu0 0
        %1423 = vmatpush1.bf16.msra.mxu0 %v1033
        %1424 = vmatprep.subr.bf16.mxu0 0
        %1425 = vmatpush1.bf16.msra.mxu0 %v1036
        %1426 = vmatprep.subr.bf16.mxu0 0
        %1427 = vmatpush1.bf16.msra.mxu0 %v1039
        %1428 = vmatprep.subr.bf16.mxu0 0
        %1429 = vmatpush1.bf16.msra.mxu0 %v1042
        %1430 = vmatprep.mubr.bf16.mxu0 %v255
        %1431 = vmatmul.mubr.bf16.gmra.mrb[0].mxu0 %v254
        %v1432 = vpop.f32.mrb[0].mxu0
        %v1433 = vadd.f32 %v1393, %v1432
        %v1434 = vpop.f32.mrb[0].mxu0
        %v1435 = vpop.f32.mrb[0].mxu0
        %v1436 = vpop.f32.mrb[0].mxu0
        %1437 = vdwg.mxu0
        %1438 = vmatprep.subr.bf16.mxu0 0
        %1439 = vmatpush1.bf16.msra.mxu0 %v1045
        %1440 = vmatprep.subr.bf16.mxu0 0
        %1441 = vmatpush1.bf16.msra.mxu0 %v1048
        %1442 = vmatprep.subr.bf16.mxu0 0
        %1443 = vmatpush1.bf16.msra.mxu0 %v1051
        %1444 = vmatprep.subr.bf16.mxu0 0
        %1445 = vmatpush1.bf16.msra.mxu0 %v1054
        %1446 = vmatprep.subr.bf16.mxu0 0
        %1447 = vmatpush1.bf16.msra.mxu0 %v1057
        %1448 = vmatprep.subr.bf16.mxu0 0
        %1449 = vmatpush1.bf16.msra.mxu0 %v1060
        %1450 = vmatprep.subr.bf16.mxu0 0
        %1451 = vmatpush1.bf16.msra.mxu0 %v1063
        %1452 = vmatprep.subr.bf16.mxu0 0
        %1453 = vmatpush1.bf16.msra.mxu0 %v1066
        %1454 = vmatprep.subr.bf16.mxu0 0
        %1455 = vmatpush1.bf16.msra.mxu0 %v1069
        %1456 = vmatprep.subr.bf16.mxu0 0
        %1457 = vmatpush1.bf16.msra.mxu0 %v1072
        %1458 = vmatprep.subr.bf16.mxu0 0
        %1459 = vmatpush1.bf16.msra.mxu0 %v1075
        %1460 = vmatprep.subr.bf16.mxu0 0
        %1461 = vmatpush1.bf16.msra.mxu0 %v1078
        %1462 = vmatprep.subr.bf16.mxu0 0
        %1463 = vmatpush1.bf16.msra.mxu0 %v1081
        %1464 = vmatprep.subr.bf16.mxu0 0
        %1465 = vmatpush1.bf16.msra.mxu0 %v1084
        %1466 = vmatprep.subr.bf16.mxu0 0
        %1467 = vmatpush1.bf16.msra.mxu0 %v1087
        %1468 = vmatprep.subr.bf16.mxu0 0
        %1469 = vmatpush1.bf16.msra.mxu0 %v1090
        %1470 = vmatprep.mubr.bf16.mxu0 %v257
        %1471 = vmatmul.mubr.bf16.gmra.mrb[0].mxu0 %v256
        %v1472 = vpop.f32.mrb[0].mxu0
        %v1473 = vadd.f32 %v1433, %v1472
        %v1474 = vpop.f32.mrb[0].mxu0
        %v1475 = vpop.f32.mrb[0].mxu0
        %v1476 = vpop.f32.mrb[0].mxu0
        %1477 = vdwg.mxu0
        %1478 = vst [vmem:[%s237] sm:$0xff] %v1352
        %1479 = vst [vmem:[%s237 + $0x8] sm:$0xff] %v1354
        %1480 = vst [vmem:[%s237 + $0x10] sm:$0xff] %v1473
        %s1481 = sand.u32 %s121, 1
        %s1482 = scalar_lea.sflag [#allocation4], %s1481
        %s1483 = sand.u32 %s121, 1
        %s1484 = smul.addr %s1483, 24
        %s1485 = scalar_lea.vmem [#allocation7], %s1484
        // Predicated region
        $region41: #{linear_fused.1} parent=31 // pred_check
          %p1486 = pneg %p131
        $region42: #{linear_fused.1} parent=31 // pred_check_branch
          %1488 = sbr.rel (%p1486) target = $region44
        $region43: #{linear_fused.1} parent=31 // pred_region
          %s1489 = smul.u32 3, %s26
          %s1491 = ssub.s32 384, 384
          %1492 = vsyncadd %s1482, %s1491
          %s1493 = smul.addr %s25, 6
          %s1494 = sadd.s32 %s1489, %s1493
          %s1495 = smul.addr %s1494, 128
          %s1496 = scalar_lea.hbm %s3, %s1495
          %s1498 = sshll.u32 %s1485, 4
          %s1499 = int_to_ptr.vmem [resolvable:$true] %s1498
          %1501 = dma.vmem_to_hbm [thread:$0]  %s1499, 384, %s1496, %s1482
        $region44: #{linear_fused.1} parent=31 // pred_fallthru
          _
      $region32: #{linear_fused.1} parent=5 // pred_fallthru
        _
      %p1502 = scmp.le.s32.totalorder 2, %s16
      // Predicated region
      $region45: #{linear_fused.1} parent=5 // pred_check
        %p1503 = pneg %p1502
      $region46: #{linear_fused.1} parent=5 // pred_check_branch
        %1505 = sbr.rel (%p1503) target = $region48
      $region47: #{linear_fused.1} parent=5 // pred_region
        %s1506 = ssub.s32 %s16, 2
        // Predicated region
        $region49: #{linear_fused.1} parent=47 // pred_check
          %p1507 = pneg %p137
        $region50: #{linear_fused.1} parent=47 // pred_check_branch
          %1509 = sbr.rel (%p1507) target = $region52
        $region51: #{linear_fused.1} parent=47 // pred_region
          %s1510 = sand.u32 %s122, 1
          %s1511 = scalar_lea.sflag [#allocation4], %s1510
          %s1512 = sand.u32 %s122, 1
          %s1513 = smul.addr %s1512, 24
          %s1514 = scalar_lea.vmem [#allocation7], %s1513
          %1515 = dma.done %s1511, 384
        $region52: #{linear_fused.1} parent=47 // pred_fallthru
          _
      $region48: #{linear_fused.1} parent=5 // pred_fallthru
        _
    $region6: #{linear_fused.1} parent=1 // loop_footer
      %s20 = sadd.s32 1, %s16
    $region7: #{linear_fused.1} parent=1 // loop_footer_branch
      %15 = sbr.rel target = $region3
    $region8: #{linear_fused.1} parent=1 // loop_exit
      _
    %1516 = vsyncpa [#allocation3], 1
    %s1517 = scalar_lea.sflag [#allocation3], 1
    %1518 = vsyncpa %s1517, 1
    %1519 = vsyncpa [#allocation6], 1
    %s1520 = scalar_lea.sflag [#allocation6], 1
    %1521 = vsyncpa %s1520, 1
    %1522 = vsyncpa [#allocation4], 1
    %s1523 = scalar_lea.sflag [#allocation4], 1
    %1524 = vsyncpa %s1523, 1

</llo_original>
